<compile_context>
chip_gen: v7x
topology: tpu7x:2x2x1
jax: 0.10.0
libtpu: 0.0.40
codegen_flags: <defaults>
</compile_context>

<pallas_src>
import math

import jax
import jax.numpy as jnp
from jax import lax
from jax.experimental import pallas as pl
from jax.experimental.pallas import tpu as pltpu

IMAGE_SIZE = 8
IN_DIM = IMAGE_SIZE * IMAGE_SIZE  # 64
H1 = 64
H2 = 16
OUT = 1


def discriminator_kernel(x_ref, w1_ref, b1_ref, w2_ref, b2_ref, w3_ref, b3_ref, o_ref):
    """One batch-tile of the full MLP: (Linear->ReLU)x2 -> Linear -> Sigmoid.

    Output is written transposed as (1, batch_tile) so the HBM writeback is
    lane-dense (full-lane vst instead of masked single-lane stores).
    """
    x = x_ref[...]            # (bt, 64) f32

    # Biases read once per grid step and broadcast.
    b1 = b1_ref[...]          # (1, H1)
    b2 = b2_ref[...]          # (1, H2)
    b3 = b3_ref[...]          # (1, 1)

    h1 = jnp.dot(x, w1_ref[...], preferred_element_type=jnp.float32) + b1
    h1 = jnp.maximum(h1, 0.0)                                         # (bt, H1)

    h2 = jnp.dot(h1, w2_ref[...], preferred_element_type=jnp.float32) + b2
    h2 = jnp.maximum(h2, 0.0)                                         # (bt, H2)

    # Final 16 -> 1 head, computed transposed: (1, 16) . (bt, 16)^T -> (1, bt).
    # Contracting both operands on their last (lane) dim keeps the batch
    # dimension in lanes, giving a lane-dense output tile.
    zt = lax.dot_general(w3_ref[...], h2,
                         (((1,), (1,)), ((), ())),
                         preferred_element_type=jnp.float32)           # (1, bt)

    o_ref[...] = jax.nn.sigmoid(zt + b3).astype(o_ref.dtype)


def _choose_batch_tile(B, *, max_tile=8192):
    """Pick a batch tile per the perf review.

    Goals:
      - as large an x DMA as possible per grid step (>=512 KB when B allows),
        so the ~0.35 us per-step fixed cost is amortized (mem/overhead bound),
      - an even, >=2-step grid so v7x's two TensorCores both get work,
      - tile % 128 == 0 so the transposed (1, bt) output block stays lane-dense,
      - small / ragged batches fall back to a single full-batch step.
    """
    if B % 256 != 0:
        return B  # ragged or tiny batch: single step, block == full array
    cap = min(B // 2, max_tile)
    cands = [bt for bt in range(128, cap + 1, 128)
             if B % bt == 0 and (B // bt) % 2 == 0]
    return max(cands) if cands else B


def discriminator_forward(x, params, *, batch_tile=None):
    """x: (B, 64) float32  ->  (B, 1) float32 (sigmoid probabilities)."""
    w1, b1, w2, b2, w3, b3 = params
    B = x.shape[0]

    if batch_tile is None:
        batch_tile = _choose_batch_tile(B)

    assert B % batch_tile == 0, "batch must be a multiple of batch_tile"
    # (8,128) tiling constraints: satisfied either by full-array blocks or by
    # batch_tile being a multiple of 128 (hence of 8).
    assert batch_tile == B or (batch_tile % 128 == 0), \
        "batch_tile must equal B or be a multiple of 128"

    grid = (B // batch_tile,)

    # Weights/biases use a constant index_map so they stay resident across the grid.
    const = lambda i: (0, 0)

    # Advisory cost hint: this kernel is tiny relative to surrounding XLA work.
    flops = 2 * B * (IN_DIM * H1 + H1 * H2 + H2 * OUT)
    bytes_accessed = 4 * (B * IN_DIM + B * OUT
                          + IN_DIM * H1 + H1 + H1 * H2 + H2 + OUT * H2 + OUT)
    cost = pl.CostEstimate(flops=flops, transcendentals=2 * B,  # sigmoid = exp + recip
                           bytes_accessed=bytes_accessed)

    out_t = pl.pallas_call(
        discriminator_kernel,
        out_shape=jax.ShapeDtypeStruct((OUT, B), jnp.float32),
        grid_spec=pltpu.PrefetchScalarGridSpec(
            num_scalar_prefetch=0,
            grid=grid,
            in_specs=[
                pl.BlockSpec((batch_tile, IN_DIM), lambda i: (i, 0)),
                pl.BlockSpec((IN_DIM, H1), const),
                pl.BlockSpec((1, H1), const),
                pl.BlockSpec((H1, H2), const),
                pl.BlockSpec((1, H2), const),
                pl.BlockSpec((OUT, H2), const),   # torch-layout (1, 16) row
                pl.BlockSpec((1, OUT), const),
            ],
            # Lane-dense transposed output tile: (1, batch_tile).
            out_specs=pl.BlockSpec((OUT, batch_tile), lambda i: (0, i)),
        ),
        compiler_params=pltpu.CompilerParams(
            # Batch-axis grid steps are independent -> shard across TCs (v7x).
            dimension_semantics=("parallel",),
        ),
        cost_estimate=cost,
    )(x, w1, b1, w2, b2, w3, b3)

    # (1, B) -> (B, 1) back in the wrapper (contiguous reinterpret, no transpose).
    return out_t.reshape(B, OUT)


def init_params(key):
    """Deterministic init mirroring torch.nn.Linear defaults: U(-1/sqrt(fan_in), 1/sqrt(fan_in)).
    w1/w2 stored as (in_features, out_features); w3 stored in torch layout (out, in);
    biases as (1, out_features)."""
    def linear(k, fan_in, fan_out, transpose):
        kw, kb = jax.random.split(k)
        bound = 1.0 / math.sqrt(fan_in)
        w_shape = (fan_in, fan_out) if transpose else (fan_out, fan_in)
        w = jax.random.uniform(kw, w_shape, jnp.float32, -bound, bound)
        b = jax.random.uniform(kb, (1, fan_out), jnp.float32, -bound, bound)
        return w, b

    k1, k2, k3 = jax.random.split(key, 3)
    w1, b1 = linear(k1, IN_DIM, H1, transpose=True)   # (64, 64), (1, 64)
    w2, b2 = linear(k2, H1, H2, transpose=True)       # (64, 16), (1, 16)
    w3, b3 = linear(k3, H2, OUT, transpose=False)     # (1, 16),  (1, 1)
    return (w1, b1, w2, b2, w3, b3)


def reference_forward(x, params):
    w1, b1, w2, b2, w3, b3 = params
    h1 = jnp.maximum(x @ w1 + b1, 0.0)
    h2 = jnp.maximum(h1 @ w2 + b2, 0.0)
    return jax.nn.sigmoid(h2 @ w3.T + b3)


if __name__ == "__main__":
    key = jax.random.PRNGKey(0)
    key, kx_small, kx_big = jax.random.split(key, 3)
    params = init_params(key)

    # Small-shape smoke test (single full-batch grid step).
    B_small = 16
    x_small = jax.random.normal(kx_small, (B_small, IN_DIM), jnp.float32)
    out_small = jax.block_until_ready(discriminator_forward(x_small, params))
    ref_small = reference_forward(x_small, params)
    assert out_small.shape == (B_small, OUT)
    assert jnp.allclose(out_small, ref_small, atol=1e-5, rtol=1e-5), "mismatch vs reference (small)"

    # Tiled path: even multi-step grid (B=1024 -> batch_tile=512, 2 parallel steps),
    # exercising the pipelined BlockSpecs and the lane-dense transposed output.
    B_big = 1024
    x_big = jax.random.normal(kx_big, (B_big, IN_DIM), jnp.float32)
    out_big = jax.block_until_ready(discriminator_forward(x_big, params))
    ref_big = reference_forward(x_big, params)
    assert out_big.shape == (B_big, OUT)
    assert jnp.allclose(out_big, ref_big, atol=1e-5, rtol=1e-5), "mismatch vs reference (tiled)"

    print("KERNEL_OK")
</pallas_src>

<mosaic_0001>
module attributes {stable_mosaic.version = 11 : i64} {
  func.func @discriminator_kernel(%arg0: i32, %arg1: memref<16x64xf32, #tpu.memory_space<vmem>>, %arg2: memref<64x64xf32, #tpu.memory_space<vmem>>, %arg3: memref<1x64xf32, #tpu.memory_space<vmem>>, %arg4: memref<64x16xf32, #tpu.memory_space<vmem>>, %arg5: memref<1x16xf32, #tpu.memory_space<vmem>>, %arg6: memref<1x16xf32, #tpu.memory_space<vmem>>, %arg7: memref<1x1xf32, #tpu.memory_space<vmem>>, %arg8: memref<1x16xf32, #tpu.memory_space<vmem>>) attributes {dimension_semantics = [#tpu.dimension_semantics<parallel>], iteration_bounds = array<i64: 1>, scalar_prefetch = 0 : i64, scratch_operands = 0 : i64, tpu.core_type = #tpu.core_type<tc>, window_params = [{transform_indices = @transform_0, window_bounds = array<i64: 16, 64>}, {pipeline_mode = #tpu.pipeline_mode<synchronous>, transform_indices = @transform_1, window_bounds = array<i64: 64, 64>}, {pipeline_mode = #tpu.pipeline_mode<synchronous>, transform_indices = @transform_2, window_bounds = array<i64: 1, 64>}, {pipeline_mode = #tpu.pipeline_mode<synchronous>, transform_indices = @transform_3, window_bounds = array<i64: 64, 16>}, {pipeline_mode = #tpu.pipeline_mode<synchronous>, transform_indices = @transform_4, window_bounds = array<i64: 1, 16>}, {pipeline_mode = #tpu.pipeline_mode<synchronous>, transform_indices = @transform_5, window_bounds = array<i64: 1, 16>}, {pipeline_mode = #tpu.pipeline_mode<synchronous>, transform_indices = @transform_6, window_bounds = array<i64: 1, 1>}, {transform_indices = @transform_7, window_bounds = array<i64: 1, 16>}]} {
    %c0 = arith.constant 0 : index
    %c0_0 = arith.constant 0 : index
    %0 = vector.load %arg1[%c0, %c0_0] : memref<16x64xf32, #tpu.memory_space<vmem>>, vector<16x64xf32>
    %c0_1 = arith.constant 0 : index
    %c0_2 = arith.constant 0 : index
    %1 = vector.load %arg3[%c0_1, %c0_2] : memref<1x64xf32, #tpu.memory_space<vmem>>, vector<1x64xf32>
    %c0_3 = arith.constant 0 : index
    %c0_4 = arith.constant 0 : index
    %2 = vector.load %arg5[%c0_3, %c0_4] : memref<1x16xf32, #tpu.memory_space<vmem>>, vector<1x16xf32>
    %c0_5 = arith.constant 0 : index
    %c0_6 = arith.constant 0 : index
    %3 = vector.load %arg7[%c0_5, %c0_6] : memref<1x1xf32, #tpu.memory_space<vmem>>, vector<1x1xf32>
    %c0_7 = arith.constant 0 : index
    %c0_8 = arith.constant 0 : index
    %4 = vector.load %arg2[%c0_7, %c0_8] : memref<64x64xf32, #tpu.memory_space<vmem>>, vector<64x64xf32>
    %cst = arith.constant dense<0.000000e+00> : vector<16x64xf32>
    %5 = tpu.matmul %0, %4, %cst {dimension_numbers = #tpu.dot_dimension_numbers<[1], [0], [0], [1], [0, 0, 1, 1], [], []>} : vector<16x64xf32>, vector<64x64xf32>, vector<16x64xf32> -> vector<16x64xf32>
    %6 = vector.broadcast %1 : vector<1x64xf32> to vector<16x64xf32>
    %7 = arith.addf %5, %6 : vector<16x64xf32>
    %cst_9 = arith.constant 0.000000e+00 : f32
    %8 = vector.broadcast %cst_9 : f32 to vector<16x64xf32>
    %9 = arith.maximumf %7, %8 : vector<16x64xf32>
    %c0_10 = arith.constant 0 : index
    %c0_11 = arith.constant 0 : index
    %10 = vector.load %arg4[%c0_10, %c0_11] : memref<64x16xf32, #tpu.memory_space<vmem>>, vector<64x16xf32>
    %cst_12 = arith.constant dense<0.000000e+00> : vector<16x16xf32>
    %11 = tpu.matmul %9, %10, %cst_12 {dimension_numbers = #tpu.dot_dimension_numbers<[1], [0], [0], [1], [0, 0, 1, 1], [], []>} : vector<16x64xf32>, vector<64x16xf32>, vector<16x16xf32> -> vector<16x16xf32>
    %12 = vector.broadcast %2 : vector<1x16xf32> to vector<16x16xf32>
    %13 = arith.addf %11, %12 : vector<16x16xf32>
    %cst_13 = arith.constant 0.000000e+00 : f32
    %14 = vector.broadcast %cst_13 : f32 to vector<16x16xf32>
    %15 = arith.maximumf %13, %14 : vector<16x16xf32>
    %c0_14 = arith.constant 0 : index
    %c0_15 = arith.constant 0 : index
    %16 = vector.load %arg6[%c0_14, %c0_15] : memref<1x16xf32, #tpu.memory_space<vmem>>, vector<1x16xf32>
    %cst_16 = arith.constant dense<0.000000e+00> : vector<1x16xf32>
    %17 = tpu.matmul %16, %15, %cst_16 {dimension_numbers = #tpu.dot_dimension_numbers<[1], [1], [0], [0], [0, 0, 1, 0], [], []>} : vector<1x16xf32>, vector<16x16xf32>, vector<1x16xf32> -> vector<1x16xf32>
    %18 = vector.broadcast %3 : vector<1x1xf32> to vector<1x16xf32>
    %19 = arith.addf %17, %18 : vector<1x16xf32>
    %20 = arith.negf %19 : vector<1x16xf32>
    %21 = math.exp %20 : vector<1x16xf32>
    %cst_17 = arith.constant 1.000000e+00 : f32
    %22 = vector.broadcast %cst_17 : f32 to vector<1x16xf32>
    %23 = arith.addf %22, %21 : vector<1x16xf32>
    %24 = arith.divf %22, %23 : vector<1x16xf32>
    %c0_18 = arith.constant 0 : index
    %c0_19 = arith.constant 0 : index
    %25 = vector.load %arg8[%c0_18, %c0_19] : memref<1x16xf32, #tpu.memory_space<vmem>>, vector<1x16xf32>
    tpu.vector_store %arg8[%c0_18, %c0_19], %24 {strides = array<i32>} : memref<1x16xf32, #tpu.memory_space<vmem>>, vector<1x16xf32>,
    return
  }
  func.func @transform_0(%arg0: i32) -> (i32, i32) {
    %c0_i32 = arith.constant 0 : i32
    %c0_i32_0 = arith.constant 0 : i32
    return %arg0, %c0_i32 : i32, i32
  }
  func.func @transform_1(%arg0: i32) -> (i32, i32) {
    %c0_i32 = arith.constant 0 : i32
    %c0_i32_0 = arith.constant 0 : i32
    %c0_i32_1 = arith.constant 0 : i32
    return %c0_i32, %c0_i32_0 : i32, i32
  }
  func.func @transform_2(%arg0: i32) -> (i32, i32) {
    %c0_i32 = arith.constant 0 : i32
    %c0_i32_0 = arith.constant 0 : i32
    %c0_i32_1 = arith.constant 0 : i32
    return %c0_i32, %c0_i32_0 : i32, i32
  }
  func.func @transform_3(%arg0: i32) -> (i32, i32) {
    %c0_i32 = arith.constant 0 : i32
    %c0_i32_0 = arith.constant 0 : i32
    %c0_i32_1 = arith.constant 0 : i32
    return %c0_i32, %c0_i32_0 : i32, i32
  }
  func.func @transform_4(%arg0: i32) -> (i32, i32) {
    %c0_i32 = arith.constant 0 : i32
    %c0_i32_0 = arith.constant 0 : i32
    %c0_i32_1 = arith.constant 0 : i32
    return %c0_i32, %c0_i32_0 : i32, i32
  }
  func.func @transform_5(%arg0: i32) -> (i32, i32) {
    %c0_i32 = arith.constant 0 : i32
    %c0_i32_0 = arith.constant 0 : i32
    %c0_i32_1 = arith.constant 0 : i32
    return %c0_i32, %c0_i32_0 : i32, i32
  }
  func.func @transform_6(%arg0: i32) -> (i32, i32) {
    %c0_i32 = arith.constant 0 : i32
    %c0_i32_0 = arith.constant 0 : i32
    %c0_i32_1 = arith.constant 0 : i32
    return %c0_i32, %c0_i32_0 : i32, i32
  }
  func.func @transform_7(%arg0: i32) -> (i32, i32) {
    %c0_i32 = arith.constant 0 : i32
    %c0_i32_0 = arith.constant 0 : i32
    return %c0_i32, %arg0 : i32, i32
  }
}

</mosaic_0001>

<llo_original>
// kernel: tpu_custom_call.1
$region0: #{tpu_custom_call.1}
  #allocation0 [shape = 'u32[]', space=smem, size = 0x4, offset = 0x4, fixed_abs, tag = 'smem constant byte address 0x4 - core index']
  #allocation1 [shape = 'u32[144,128]{1,0:T(1,128)}', space=vmem, size = 0x12000, scoped, tag = 'internal scratch']
  #allocation2 [shape = 'f32[1,1]{1,0:T(1,128)S(1)}', space=vmem, size = 0x200, scoped, tag = 'scoped memory for tpu_custom_call.1']
  %s0 = inlined_call_operand.vmem [shape: f32[16,64], index: 0, kind: input, shape index: {}]
  %s1 = inlined_call_operand.vmem [shape: f32[64,64], index: 1, kind: input, shape index: {}]
  %s2 = inlined_call_operand.vmem [shape: f32[1,64], index: 2, kind: input, shape index: {}]
  %s3 = inlined_call_operand.vmem [shape: f32[64,16], index: 3, kind: input, shape index: {}]
  %s4 = inlined_call_operand.vmem [shape: f32[1,16], index: 4, kind: input, shape index: {}]
  %s5 = inlined_call_operand.vmem [shape: f32[1,16], index: 5, kind: input, shape index: {}]
  %s6 = inlined_call_operand.<no memory space> [shape: f32[1,1], index: 6, kind: input, shape index: {}]
  %s7 = inlined_call_operand.hbm [shape: f32[1,16], index: 7, kind: output, shape index: {}]
  %s8 = sld [smem:[#allocation0]]
  $region38: #{tpu_custom_call.1} parent=0
    _
  %s10 = ssub.s32 1, %s8
  %s11 = scalar_select 0, %s10, %s8
  %v12 = vstv %s6
  %13 = vst [vmem:[#allocation2] sm:$0x1] %v12
  $region1: #{tpu_custom_call.1} parent=0
    #allocation3 [shape = 'u8[512]{0}', space=vmem, size = 0x400, scoped, tag = 'output window, operand 0, single buffered']
    #allocation4 [shape = 's32[1]{0}', space=sflag, size = 0x4, scoped, tag = 'scoped memory for tpu_custom_call.1']
    %14 = vsyncpa [#allocation4], 0
    // Predicated region
    $region2: #{tpu_custom_call.1} parent=1 // pred_check
      _
    $region3: #{tpu_custom_call.1} parent=1 // pred_check_branch
      %16 = sbr.rel (0) target = $region5
    $region4: #{tpu_custom_call.1} parent=1 // pred_region
      _
    $region5: #{tpu_custom_call.1} parent=1 // pred_fallthru
      _
    // Predicated region
    $region6: #{tpu_custom_call.1} parent=1 // pred_check
      _
    $region7: #{tpu_custom_call.1} parent=1 // pred_check_branch
      %18 = sbr.rel (0) target = $region9
    $region8: #{tpu_custom_call.1} parent=1 // pred_region
      _
    $region9: #{tpu_custom_call.1} parent=1 // pred_fallthru
      _
    // Predicated region
    $region10: #{tpu_custom_call.1} parent=1 // pred_check
      _
    $region11: #{tpu_custom_call.1} parent=1 // pred_check_branch
      %20 = sbr.rel (0) target = $region13
    $region12: #{tpu_custom_call.1} parent=1 // pred_region
      _
    $region13: #{tpu_custom_call.1} parent=1 // pred_fallthru
      _
    // Predicated region
    $region14: #{tpu_custom_call.1} parent=1 // pred_check
      _
    $region15: #{tpu_custom_call.1} parent=1 // pred_check_branch
      %22 = sbr.rel (0) target = $region17
    $region16: #{tpu_custom_call.1} parent=1 // pred_region
      _
    $region17: #{tpu_custom_call.1} parent=1 // pred_fallthru
      _
    // Predicated region
    $region18: #{tpu_custom_call.1} parent=1 // pred_check
      _
    $region19: #{tpu_custom_call.1} parent=1 // pred_check_branch
      %24 = sbr.rel (0) target = $region21
    $region20: #{tpu_custom_call.1} parent=1 // pred_region
      _
    $region21: #{tpu_custom_call.1} parent=1 // pred_fallthru
      _
    // Predicated region
    $region22: #{tpu_custom_call.1} parent=1 // pred_check
      _
    $region23: #{tpu_custom_call.1} parent=1 // pred_check_branch
      %26 = sbr.rel (0) target = $region25
    $region24: #{tpu_custom_call.1} parent=1 // pred_region
      _
    $region25: #{tpu_custom_call.1} parent=1 // pred_fallthru
      _
    // Predicated region
    $region26: #{tpu_custom_call.1} parent=1 // pred_check
      _
    $region27: #{tpu_custom_call.1} parent=1 // pred_check_branch
      %28 = sbr.rel (0) target = $region29
    $region28: #{tpu_custom_call.1} parent=1 // pred_region
      _
    $region29: #{tpu_custom_call.1} parent=1 // pred_fallthru
      _
    %v29 = vld [vmem:[%s0] sm:$0xff]
    %v30 = vld [vmem:[%s0 + $0x8] sm:$0xff]
    %v31 = vld [vmem:[%s2] sm:$0x1]
    %v32 = vld [vmem:[%s4] sm:$0x1]
    %v33 = vld [vmem:[#allocation2] sm:$0x1]
    %v34 = vld [vmem:[%s1] sm:$0xff]
    %v35 = vld [vmem:[%s1 + $0x8] sm:$0xff]
    %v36 = vld [vmem:[%s1 + $0x10] sm:$0xff]
    %v37 = vld [vmem:[%s1 + $0x18] sm:$0xff]
    %v38 = vld [vmem:[%s1 + $0x20] sm:$0xff]
    %v39 = vld [vmem:[%s1 + $0x28] sm:$0xff]
    %v40 = vld [vmem:[%s1 + $0x30] sm:$0xff]
    %v41 = vld [vmem:[%s1 + $0x38] sm:$0xff]
    %v43 = vlaneseq
    %v44 = vshrl.u32 %v43, 7
    %v45 = vsub.s32 0, %v44
    %v46 = vrot.slane %v31, %v45
    %vm48 = vcmask 523264
    %v50 = vsel %vm48, %v29, 0
    %v53 = vsel %vm48, %v30, 0
    %55 = vmatprep.subr.mxu0 0.0
    %56 = vmatpush1.msra.mxu0 %v34
    %57 = vmatprep.subr.mxu0 0.0
    %58 = vmatpush1.msra.mxu0 %v35
    %59 = vmatprep.subr.mxu0 0.0
    %60 = vmatpush1.msra.mxu0 %v36
    %61 = vmatprep.subr.mxu0 0.0
    %62 = vmatpush1.msra.mxu0 %v37
    %63 = vmatprep.subr.mxu0 0.0
    %64 = vmatpush1.msra.mxu0 %v38
    %65 = vmatprep.subr.mxu0 0.0
    %66 = vmatpush1.msra.mxu0 %v39
    %67 = vmatprep.subr.mxu0 0.0
    %68 = vmatpush1.msra.mxu0 %v40
    %69 = vmatprep.subr.mxu0 0.0
    %70 = vmatpush1.msra.mxu0 %v41
    %71 = vmatprep.subr.mxu0 0.0
    %72 = vmatpush1.msra.mxu0 0.0
    %73 = vmatprep.subr.mxu0 0.0
    %74 = vmatpush1.msra.mxu0 0.0
    %75 = vmatprep.subr.mxu0 0.0
    %76 = vmatpush1.msra.mxu0 0.0
    %77 = vmatprep.subr.mxu0 0.0
    %78 = vmatpush1.msra.mxu0 0.0
    %79 = vmatprep.subr.mxu0 0.0
    %80 = vmatpush1.msra.mxu0 0.0
    %81 = vmatprep.subr.mxu0 0.0
    %82 = vmatpush1.msra.mxu0 0.0
    %83 = vmatprep.subr.mxu0 0.0
    %84 = vmatpush1.msra.mxu0 0.0
    %85 = vmatprep.subr.mxu0 0.0
    %86 = vmatpush1.msra.mxu0 0.0
    %87 = vmatprep.subr.mxu0 0.0
    %88 = vmatpush1.msra.mxu0 0.0
    %89 = vmatprep.subr.mxu0 0.0
    %90 = vmatpush1.msra.mxu0 0.0
    %91 = vmatprep.subr.mxu0 0.0
    %92 = vmatpush1.msra.mxu0 0.0
    %93 = vmatprep.subr.mxu0 0.0
    %94 = vmatpush1.msra.mxu0 0.0
    %95 = vmatprep.subr.mxu0 0.0
    %96 = vmatpush1.msra.mxu0 0.0
    %97 = vmatprep.subr.mxu0 0.0
    %98 = vmatpush1.msra.mxu0 0.0
    %99 = vmatprep.subr.mxu0 0.0
    %100 = vmatpush1.msra.mxu0 0.0
    %101 = vmatprep.subr.mxu0 0.0
    %102 = vmatpush1.msra.mxu0 0.0
    %103 = vmatprep.subr.mxu0 0.0
    %104 = vmatpush1.msra.mxu0 0.0
    %105 = vmatprep.subr.mxu0 0.0
    %106 = vmatpush1.msra.mxu0 0.0
    %107 = vmatprep.subr.mxu0 0.0
    %108 = vmatpush1.msra.mxu0 0.0
    %109 = vmatprep.subr.mxu0 0.0
    %110 = vmatpush1.msra.mxu0 0.0
    %111 = vmatprep.subr.mxu0 0.0
    %112 = vmatpush1.msra.mxu0 0.0
    %113 = vmatprep.subr.mxu0 0.0
    %114 = vmatpush1.msra.mxu0 0.0
    %115 = vmatprep.subr.mxu0 0.0
    %116 = vmatpush1.msra.mxu0 0.0
    %117 = vmatprep.subr.mxu0 0.0
    %118 = vmatpush1.msra.mxu0 0.0
    %119 = vmatprep.mubr.f32.mxu0 0.0
    %120 = vmatmul.mubr.f32.gmra.mrb[0].mxu0 %v50
    %v121 = vpop.f32.mrb[0].mxu0
    %v122 = vadd.f32 %v46, %v121
    %v123 = vpop.f32.mrb[0].mxu0
    %124 = vmatprep.mubr.f32.mxu0 0.0
    %125 = vmatmul.mubr.f32.gmra.mrb[0].mxu0 %v53
    %v126 = vpop.f32.mrb[0].mxu0
    %v127 = vadd.f32 %v46, %v126
    %v128 = vpop.f32.mrb[0].mxu0
    %129 = vdwg.mxu0
    %v130 = vmax.f32 %v122, 0.0
    %v131 = vmax.f32 %v127, 0.0
    %v132 = vld [vmem:[%s3] sm:$0xff]
    %v133 = vld [vmem:[%s3 + $0x8] sm:$0xff]
    %v134 = vld [vmem:[%s3 + $0x10] sm:$0xff]
    %v135 = vld [vmem:[%s3 + $0x18] sm:$0xff]
    %v136 = vld [vmem:[%s3 + $0x20] sm:$0xff]
    %v137 = vld [vmem:[%s3 + $0x28] sm:$0xff]
    %v138 = vld [vmem:[%s3 + $0x30] sm:$0xff]
    %v139 = vld [vmem:[%s3 + $0x38] sm:$0xff]
    %v141 = vlaneseq
    %v142 = vshrl.u32 %v141, 7
    %v143 = vsub.s32 0, %v142
    %v144 = vrot.slane %v32, %v143
    %v147 = vsel %vm48, %v130, 0
    %v150 = vsel %vm48, %v131, 0
    %152 = vmatprep.subr.mxu0 0.0
    %153 = vmatpush1.msra.mxu0 %v132
    %154 = vmatprep.subr.mxu0 0.0
    %155 = vmatpush1.msra.mxu0 %v133
    %156 = vmatprep.subr.mxu0 0.0
    %157 = vmatpush1.msra.mxu0 %v134
    %158 = vmatprep.subr.mxu0 0.0
    %159 = vmatpush1.msra.mxu0 %v135
    %160 = vmatprep.subr.mxu0 0.0
    %161 = vmatpush1.msra.mxu0 %v136
    %162 = vmatprep.subr.mxu0 0.0
    %163 = vmatpush1.msra.mxu0 %v137
    %164 = vmatprep.subr.mxu0 0.0
    %165 = vmatpush1.msra.mxu0 %v138
    %166 = vmatprep.subr.mxu0 0.0
    %167 = vmatpush1.msra.mxu0 %v139
    %168 = vmatprep.subr.mxu0 0.0
    %169 = vmatpush1.msra.mxu0 0.0
    %170 = vmatprep.subr.mxu0 0.0
    %171 = vmatpush1.msra.mxu0 0.0
    %172 = vmatprep.subr.mxu0 0.0
    %173 = vmatpush1.msra.mxu0 0.0
    %174 = vmatprep.subr.mxu0 0.0
    %175 = vmatpush1.msra.mxu0 0.0
    %176 = vmatprep.subr.mxu0 0.0
    %177 = vmatpush1.msra.mxu0 0.0
    %178 = vmatprep.subr.mxu0 0.0
    %179 = vmatpush1.msra.mxu0 0.0
    %180 = vmatprep.subr.mxu0 0.0
    %181 = vmatpush1.msra.mxu0 0.0
    %182 = vmatprep.subr.mxu0 0.0
    %183 = vmatpush1.msra.mxu0 0.0
    %184 = vmatprep.subr.mxu0 0.0
    %185 = vmatpush1.msra.mxu0 0.0
    %186 = vmatprep.subr.mxu0 0.0
    %187 = vmatpush1.msra.mxu0 0.0
    %188 = vmatprep.subr.mxu0 0.0
    %189 = vmatpush1.msra.mxu0 0.0
    %190 = vmatprep.subr.mxu0 0.0
    %191 = vmatpush1.msra.mxu0 0.0
    %192 = vmatprep.subr.mxu0 0.0
    %193 = vmatpush1.msra.mxu0 0.0
    %194 = vmatprep.subr.mxu0 0.0
    %195 = vmatpush1.msra.mxu0 0.0
    %196 = vmatprep.subr.mxu0 0.0
    %197 = vmatpush1.msra.mxu0 0.0
    %198 = vmatprep.subr.mxu0 0.0
    %199 = vmatpush1.msra.mxu0 0.0
    %200 = vmatprep.subr.mxu0 0.0
    %201 = vmatpush1.msra.mxu0 0.0
    %202 = vmatprep.subr.mxu0 0.0
    %203 = vmatpush1.msra.mxu0 0.0
    %204 = vmatprep.subr.mxu0 0.0
    %205 = vmatpush1.msra.mxu0 0.0
    %206 = vmatprep.subr.mxu0 0.0
    %207 = vmatpush1.msra.mxu0 0.0
    %208 = vmatprep.subr.mxu0 0.0
    %209 = vmatpush1.msra.mxu0 0.0
    %210 = vmatprep.subr.mxu0 0.0
    %211 = vmatpush1.msra.mxu0 0.0
    %212 = vmatprep.subr.mxu0 0.0
    %213 = vmatpush1.msra.mxu0 0.0
    %214 = vmatprep.subr.mxu0 0.0
    %215 = vmatpush1.msra.mxu0 0.0
    %216 = vmatprep.mubr.f32.mxu0 0.0
    %217 = vmatmul.mubr.f32.gmra.mrb[0].mxu0 %v147
    %v218 = vpop.f32.mrb[0].mxu0
    %v219 = vadd.f32 %v144, %v218
    %v220 = vpop.f32.mrb[0].mxu0
    %221 = vmatprep.mubr.f32.mxu0 0.0
    %222 = vmatmul.mubr.f32.gmra.mrb[0].mxu0 %v150
    %v223 = vpop.f32.mrb[0].mxu0
    %v224 = vadd.f32 %v144, %v223
    %v225 = vpop.f32.mrb[0].mxu0
    %226 = vdwg.mxu0
    %v227 = vmax.f32 %v219, 0.0
    %v228 = vmax.f32 %v224, 0.0
    %v229 = vld [vmem:[%s5] sm:$0x1]
    %231 = vset.pattern.permute.xlu0 0
    %232 = vperm.xlu0 %231, %v33
    %v233 = vpop.permute.xlu0 %232
    %v235 = vlaneseq
    %v236 = vshrl.u32 %v235, 7
    %v237 = vsub.s32 0, %v236
    %v238 = vrot.slane %v233, %v237
    %vm239 = vcmask 130048
    %v241 = vsel %vm239, %v229, 0
    %v244 = vsel %vm239, %v227, 0
    %v247 = vsel %vm239, %v228, 0
    %249 = vmatprep.subr.mxu0 0.0
    %250 = vmatpush1.xpose.msra.mxu0 %v244
    %251 = vmatprep.subr.mxu0 0.0
    %252 = vmatpush1.xpose.msra.mxu0 %v247
    %253 = vmatprep.subr.mxu0 0.0
    %254 = vmatpush1.xpose.msra.mxu0 0.0
    %255 = vmatprep.subr.mxu0 0.0
    %256 = vmatpush1.xpose.msra.mxu0 0.0
    %257 = vmatprep.subr.mxu0 0.0
    %258 = vmatpush1.xpose.msra.mxu0 0.0
    %259 = vmatprep.subr.mxu0 0.0
    %260 = vmatpush1.xpose.msra.mxu0 0.0
    %261 = vmatprep.subr.mxu0 0.0
    %262 = vmatpush1.xpose.msra.mxu0 0.0
    %263 = vmatprep.subr.mxu0 0.0
    %264 = vmatpush1.xpose.msra.mxu0 0.0
    %265 = vmatprep.subr.mxu0 0.0
    %266 = vmatpush1.xpose.msra.mxu0 0.0
    %267 = vmatprep.subr.mxu0 0.0
    %268 = vmatpush1.xpose.msra.mxu0 0.0
    %269 = vmatprep.subr.mxu0 0.0
    %270 = vmatpush1.xpose.msra.mxu0 0.0
    %271 = vmatprep.subr.mxu0 0.0
    %272 = vmatpush1.xpose.msra.mxu0 0.0
    %273 = vmatprep.subr.mxu0 0.0
    %274 = vmatpush1.xpose.msra.mxu0 0.0
    %275 = vmatprep.subr.mxu0 0.0
    %276 = vmatpush1.xpose.msra.mxu0 0.0
    %277 = vmatprep.subr.mxu0 0.0
    %278 = vmatpush1.xpose.msra.mxu0 0.0
    %279 = vmatprep.subr.mxu0 0.0
    %280 = vmatpush1.xpose.msra.mxu0 0.0
    %281 = vmatprep.subr.mxu0 0.0
    %282 = vmatpush1.xpose.msra.mxu0 0.0
    %283 = vmatprep.subr.mxu0 0.0
    %284 = vmatpush1.xpose.msra.mxu0 0.0
    %285 = vmatprep.subr.mxu0 0.0
    %286 = vmatpush1.xpose.msra.mxu0 0.0
    %287 = vmatprep.subr.mxu0 0.0
    %288 = vmatpush1.xpose.msra.mxu0 0.0
    %289 = vmatprep.subr.mxu0 0.0
    %290 = vmatpush1.xpose.msra.mxu0 0.0
    %291 = vmatprep.subr.mxu0 0.0
    %292 = vmatpush1.xpose.msra.mxu0 0.0
    %293 = vmatprep.subr.mxu0 0.0
    %294 = vmatpush1.xpose.msra.mxu0 0.0
    %295 = vmatprep.subr.mxu0 0.0
    %296 = vmatpush1.xpose.msra.mxu0 0.0
    %297 = vmatprep.subr.mxu0 0.0
    %298 = vmatpush1.xpose.msra.mxu0 0.0
    %299 = vmatprep.subr.mxu0 0.0
    %300 = vmatpush1.xpose.msra.mxu0 0.0
    %301 = vmatprep.subr.mxu0 0.0
    %302 = vmatpush1.xpose.msra.mxu0 0.0
    %303 = vmatprep.subr.mxu0 0.0
    %304 = vmatpush1.xpose.msra.mxu0 0.0
    %305 = vmatprep.subr.mxu0 0.0
    %306 = vmatpush1.xpose.msra.mxu0 0.0
    %307 = vmatprep.subr.mxu0 0.0
    %308 = vmatpush1.xpose.msra.mxu0 0.0
    %309 = vmatprep.subr.mxu0 0.0
    %310 = vmatpush1.xpose.msra.mxu0 0.0
    %311 = vmatprep.subr.mxu0 0.0
    %312 = vmatpush1.xpose.msra.mxu0 0.0
    %313 = vmatprep.mubr.f32.mxu0 0.0
    %314 = vmatmul.mubr.f32.gmra.mrb[0].mxu0 %v241
    %v315 = vpop.f32.mrb[0].mxu0
    %v316 = vadd.f32 %v238, %v315
    %v317 = vpop.f32.mrb[0].mxu0
    %318 = vdwg.mxu0
    %v319 = vxor.u32 %v316, 2147483648
    %v320 = vmul.f32 %v319, 1.442695
    %v321 = vpow.pop %v320
    %v322 = vadd.f32 %v321, 1.0
    %v323 = vrcp.pop %v322
    %v324 = vmul.f32 1.0, %v323
    %vm325 = vcmask 122880
    %326 = vst.msk [vmem:[#allocation3] sm:$0x1] %vm325, %v324
    // Predicated region
    $region30: #{tpu_custom_call.1} parent=1 // pred_check
      _
    $region31: #{tpu_custom_call.1} parent=1 // pred_check_branch
      %328 = sbr.rel (0) target = $region33
    $region32: #{tpu_custom_call.1} parent=1 // pred_region
      %s330 = ssub.s32 16, 16
      %331 = vsyncadd [#allocation4], %s330
      %s333 = sshll.u32 [#allocation3], 4
      %s334 = int_to_ptr.vmem [resolvable:$true] %s333
      %336 = dma.vmem_to_hbm [thread:$0]  %s334, 16, %s7, [#allocation4]
    $region33: #{tpu_custom_call.1} parent=1 // pred_fallthru
      _
    // Predicated region
    $region34: #{tpu_custom_call.1} parent=1 // pred_check
      _
    $region35: #{tpu_custom_call.1} parent=1 // pred_check_branch
      %338 = sbr.rel (0) target = $region37
    $region36: #{tpu_custom_call.1} parent=1 // pred_region
      %339 = dma.done [#allocation4], 16
    $region37: #{tpu_custom_call.1} parent=1 // pred_fallthru
      _
    %340 = vsyncpa [#allocation4], 1

</llo_original>
